<compile_context>
chip_gen: v6e
topology: v6e:2x2x1
jax: 0.10.0
libtpu: 0.0.40
codegen_flags: <defaults>
</compile_context>

<pallas_src>
import jax
import jax.numpy as jnp
from jax import lax
from jax.experimental import pallas as pl
from jax.experimental.pallas import tpu as pltpu


# ---------------------------------------------------------------------------
# Fused block kernel: conv1+ReLU -> conv2+ReLU -> (encoder out, maxpooled out)
# ---------------------------------------------------------------------------
def _shifted_stack(v):
    """(C, L) -> (3C, L) im2col for a K=3 'same' conv: rows [x[l-1]; x[l]; x[l+1]], zero-padded."""
    C, L = v.shape
    zero = jnp.zeros((C, 1), v.dtype)
    v_prev = jnp.concatenate([zero, v[:, : L - 1]], axis=1)   # column l holds x[:, l-1]
    v_next = jnp.concatenate([v[:, 1:], zero], axis=1)        # column l holds x[:, l+1]
    return jnp.concatenate([v_prev, v, v_next], axis=0)       # tap-major: (3C, L)


def _conv3_relu(v, w_flat, b_col):
    """v: (Cin, L); w_flat: (Cout, 3*Cin); b_col: (Cout, 1). Returns relu(conv1d_same(v))."""
    vcol = _shifted_stack(v)                                                  # (3*Cin, L)
    y = jnp.dot(w_flat, vcol, preferred_element_type=jnp.float32) + b_col     # (Cout, L)
    return jnp.maximum(y, 0.0)


def _block_kernel(x_ref, w1_ref, b1_ref, w2_ref, b2_ref, enc_ref, pool_ref):
    # x_ref   : (1, Cin, L)      input activation (NCL, channels on sublanes, L on lanes)
    # w1_ref  : (Cout, 3*Cin)    conv1 weights, taps folded into contraction dim
    # b1_ref  : (Cout, 1)
    # w2_ref  : (Cout, 3*Cout)   conv2 weights
    # b2_ref  : (Cout, 1)
    # enc_ref : (1, Cout, L)     pre-pool block output (what the PyTorch Encoder returns)
    # pool_ref: (1, Cout, L//2)  maxpooled output fed into the next block
    L = x_ref.shape[2]
    half = pool_ref.shape[2]

    x = x_ref[0].astype(jnp.float32)                                          # (Cin, L)
    y1 = _conv3_relu(x, w1_ref[...].astype(jnp.float32), b1_ref[...].astype(jnp.float32))
    y2 = _conv3_relu(y1, w2_ref[...].astype(jnp.float32), b2_ref[...].astype(jnp.float32))

    enc_ref[0] = y2.astype(enc_ref.dtype)

    # MaxPool1d(kernel_size=2, stride=2) along L, fused into the epilogue.
    # Even/odd column selection via 0/1 matmuls keeps work on the MXU and avoids
    # strided lane slicing (y2 is finite post-ReLU, so the zero-products are exact).
    row = lax.broadcasted_iota(jnp.int32, (L, half), 0)
    col = lax.broadcasted_iota(jnp.int32, (L, half), 1)
    sel_even = (row == 2 * col).astype(jnp.float32)
    sel_odd = (row == 2 * col + 1).astype(jnp.float32)
    pooled = jnp.maximum(
        jnp.dot(y2, sel_even, preferred_element_type=jnp.float32),
        jnp.dot(y2, sel_odd, preferred_element_type=jnp.float32),
    )
    pool_ref[0] = pooled.astype(pool_ref.dtype)


# ---------------------------------------------------------------------------
# Wrapper: one fused pallas_call per encoder block
# ---------------------------------------------------------------------------
def encoder_block(x_ncl, w1, b1, w2, b2):
    """x_ncl: (B, Cin, L); w*: PyTorch Conv1d weights (Cout, Cin, 3); b*: (Cout,).
    Returns (encoder_output (B, Cout, L), pooled (B, Cout, L//2))."""
    B, Cin, L = x_ncl.shape
    Cout = w1.shape[0]
    half = L // 2

    # (Cout, C, K) -> (Cout, K, C) -> (Cout, 3*C) so column k*C + c matches im2col row order.
    w1f = jnp.transpose(w1, (0, 2, 1)).reshape(Cout, 3 * Cin).astype(jnp.float32)
    w2f = jnp.transpose(w2, (0, 2, 1)).reshape(Cout, 3 * Cout).astype(jnp.float32)
    b1c = b1.reshape(Cout, 1).astype(jnp.float32)
    b2c = b2.reshape(Cout, 1).astype(jnp.float32)

    enc, pooled = pl.pallas_call(
        _block_kernel,
        out_shape=(
            jax.ShapeDtypeStruct((B, Cout, L), x_ncl.dtype),
            jax.ShapeDtypeStruct((B, Cout, half), x_ncl.dtype),
        ),
        grid=(B,),
        in_specs=[
            pl.BlockSpec((1, Cin, L), lambda b: (b, 0, 0)),
            pl.BlockSpec((Cout, 3 * Cin), lambda b: (0, 0)),
            pl.BlockSpec((Cout, 1), lambda b: (0, 0)),
            pl.BlockSpec((Cout, 3 * Cout), lambda b: (0, 0)),
            pl.BlockSpec((Cout, 1), lambda b: (0, 0)),
        ],
        out_specs=(
            pl.BlockSpec((1, Cout, L), lambda b: (b, 0, 0)),
            pl.BlockSpec((1, Cout, half), lambda b: (b, 0, 0)),
        ),
        compiler_params=pltpu.CompilerParams(dimension_semantics=("parallel",)),
    )(x_ncl, w1f, b1c, w2f, b2c)
    return enc, pooled


def encoder_forward(params, x_ncl):
    """Matches PyTorch Encoder.forward: returns list of pre-pool block outputs (NCL)."""
    x = x_ncl
    encoder_outputs = []
    for (w1, b1, w2, b2) in params:
        enc, x = encoder_block(x, w1, b1, w2, b2)
        encoder_outputs.append(enc)
    return encoder_outputs


# ---------------------------------------------------------------------------
# Parameter init (deterministic, PyTorch-shaped: Conv1d weight = (Cout, Cin, K))
# ---------------------------------------------------------------------------
def init_encoder_params(key, channels):
    params = []
    for i in range(len(channels) - 1):
        cin, cout = channels[i], channels[i + 1]
        key, k1, k2, k3, k4 = jax.random.split(key, 5)
        bound1 = 1.0 / (cin * 3) ** 0.5
        bound2 = 1.0 / (cout * 3) ** 0.5
        w1 = jax.random.uniform(k1, (cout, cin, 3), jnp.float32, -bound1, bound1)
        b1 = jax.random.uniform(k2, (cout,), jnp.float32, -bound1, bound1)
        w2 = jax.random.uniform(k3, (cout, cout, 3), jnp.float32, -bound2, bound2)
        b2 = jax.random.uniform(k4, (cout,), jnp.float32, -bound2, bound2)
        params.append((w1, b1, w2, b2))
    return params


# ---------------------------------------------------------------------------
# Pure-JAX reference (for correctness check only)
# ---------------------------------------------------------------------------
def _ref_conv_relu(x_ncl, w, b):
    y = lax.conv_general_dilated(
        x_ncl, w, window_strides=(1,), padding="SAME",
        dimension_numbers=("NCH", "OIH", "NCH"))
    return jnp.maximum(y + b[None, :, None], 0.0)


def ref_encoder(params, x_ncl):
    x = x_ncl
    outs = []
    for (w1, b1, w2, b2) in params:
        x = _ref_conv_relu(x, w1, b1)
        x = _ref_conv_relu(x, w2, b2)
        outs.append(x)
        B, C, L = x.shape
        x = jnp.max(x.reshape(B, C, L // 2, 2), axis=-1)
    return outs


if __name__ == "__main__":
    key = jax.random.PRNGKey(0)
    channels = [4, 8, 16]     # Encoder(channels) -> 2 blocks: 4->8, 8->16
    B, L = 2, 16

    key, kx, kp = jax.random.split(key, 3)
    x = jax.random.normal(kx, (B, channels[0], L), jnp.float32)  # PyTorch NCL input
    params = init_encoder_params(kp, channels)

    outs = encoder_forward(params, x)
    outs = [jax.block_until_ready(o) for o in outs]

    refs = ref_encoder(params, x)
    for o, r in zip(outs, refs):
        assert o.shape == r.shape, (o.shape, r.shape)
        assert jnp.allclose(o, r, atol=1e-5, rtol=1e-5), float(jnp.max(jnp.abs(o - r)))

    print("KERNEL_OK")
</pallas_src>

<mosaic_0001>
module attributes {stable_mosaic.version = 11 : i64} {
  func.func @_block_kernel(%arg0: i32, %arg1: memref<1x4x16xf32, #tpu.memory_space<vmem>>, %arg2: memref<8x12xf32, #tpu.memory_space<vmem>>, %arg3: memref<8x1xf32, #tpu.memory_space<vmem>>, %arg4: memref<8x24xf32, #tpu.memory_space<vmem>>, %arg5: memref<8x1xf32, #tpu.memory_space<vmem>>, %arg6: memref<1x8x16xf32, #tpu.memory_space<vmem>>, %arg7: memref<1x8x8xf32, #tpu.memory_space<vmem>>) attributes {dimension_semantics = [#tpu.dimension_semantics<parallel>], iteration_bounds = array<i64: 2>, scalar_prefetch = 0 : i64, scratch_operands = 0 : i64, tpu.core_type = #tpu.core_type<tc>, window_params = [{transform_indices = @transform_0, window_bounds = array<i64: 1, 4, 16>}, {pipeline_mode = #tpu.pipeline_mode<synchronous>, transform_indices = @transform_1, window_bounds = array<i64: 8, 12>}, {pipeline_mode = #tpu.pipeline_mode<synchronous>, transform_indices = @transform_2, window_bounds = array<i64: 8, 1>}, {pipeline_mode = #tpu.pipeline_mode<synchronous>, transform_indices = @transform_3, window_bounds = array<i64: 8, 24>}, {pipeline_mode = #tpu.pipeline_mode<synchronous>, transform_indices = @transform_4, window_bounds = array<i64: 8, 1>}, {transform_indices = @transform_5, window_bounds = array<i64: 1, 8, 16>}, {transform_indices = @transform_6, window_bounds = array<i64: 1, 8, 8>}]} {
    %c0 = arith.constant 0 : index
    %c0_0 = arith.constant 0 : index
    %c0_1 = arith.constant 0 : index
    %0 = vector.load %arg1[%c0, %c0_0, %c0_1] : memref<1x4x16xf32, #tpu.memory_space<vmem>>, vector<1x4x16xf32>
    %1 = vector.shape_cast %0 : vector<1x4x16xf32> to vector<4x16xf32>
    %c0_2 = arith.constant 0 : index
    %c0_3 = arith.constant 0 : index
    %2 = vector.load %arg2[%c0_2, %c0_3] : memref<8x12xf32, #tpu.memory_space<vmem>>, vector<8x12xf32>
    %c0_4 = arith.constant 0 : index
    %c0_5 = arith.constant 0 : index
    %3 = vector.load %arg3[%c0_4, %c0_5] : memref<8x1xf32, #tpu.memory_space<vmem>>, vector<8x1xf32>
    %cst = arith.constant 0.000000e+00 : f32
    %4 = vector.broadcast %cst : f32 to vector<4x1xf32>
    %5 = vector.extract_strided_slice %1 {offsets = [0, 0], sizes = [4, 15], strides = [1, 1]} : vector<4x16xf32> to vector<4x15xf32>
    %6 = tpu.concatenate %4, %5 in 1 : vector<4x1xf32>, vector<4x15xf32> -> vector<4x16xf32>
    %7 = vector.extract_strided_slice %1 {offsets = [0, 1], sizes = [4, 15], strides = [1, 1]} : vector<4x16xf32> to vector<4x15xf32>
    %8 = tpu.concatenate %7, %4 in 1 : vector<4x15xf32>, vector<4x1xf32> -> vector<4x16xf32>
    %9 = tpu.concatenate %6, %1, %8 in 0 : vector<4x16xf32>, vector<4x16xf32>, vector<4x16xf32> -> vector<12x16xf32>
    %cst_6 = arith.constant dense<0.000000e+00> : vector<8x16xf32>
    %10 = tpu.matmul %2, %9, %cst_6 {dimension_numbers = #tpu.dot_dimension_numbers<[1], [0], [0], [1], [0, 0, 1, 1], [], []>} : vector<8x12xf32>, vector<12x16xf32>, vector<8x16xf32> -> vector<8x16xf32>
    %11 = vector.broadcast %3 : vector<8x1xf32> to vector<8x16xf32>
    %12 = arith.addf %10, %11 : vector<8x16xf32>
    %cst_7 = arith.constant 0.000000e+00 : f32
    %13 = vector.broadcast %cst_7 : f32 to vector<8x16xf32>
    %14 = arith.maximumf %12, %13 : vector<8x16xf32>
    %c0_8 = arith.constant 0 : index
    %c0_9 = arith.constant 0 : index
    %15 = vector.load %arg4[%c0_8, %c0_9] : memref<8x24xf32, #tpu.memory_space<vmem>>, vector<8x24xf32>
    %c0_10 = arith.constant 0 : index
    %c0_11 = arith.constant 0 : index
    %16 = vector.load %arg5[%c0_10, %c0_11] : memref<8x1xf32, #tpu.memory_space<vmem>>, vector<8x1xf32>
    %cst_12 = arith.constant 0.000000e+00 : f32
    %17 = vector.broadcast %cst_12 : f32 to vector<8x1xf32>
    %18 = vector.extract_strided_slice %14 {offsets = [0, 0], sizes = [8, 15], strides = [1, 1]} : vector<8x16xf32> to vector<8x15xf32>
    %19 = tpu.concatenate %17, %18 in 1 : vector<8x1xf32>, vector<8x15xf32> -> vector<8x16xf32>
    %20 = vector.extract_strided_slice %14 {offsets = [0, 1], sizes = [8, 15], strides = [1, 1]} : vector<8x16xf32> to vector<8x15xf32>
    %21 = tpu.concatenate %20, %17 in 1 : vector<8x15xf32>, vector<8x1xf32> -> vector<8x16xf32>
    %22 = tpu.concatenate %19, %14, %21 in 0 : vector<8x16xf32>, vector<8x16xf32>, vector<8x16xf32> -> vector<24x16xf32>
    %cst_13 = arith.constant dense<0.000000e+00> : vector<8x16xf32>
    %23 = tpu.matmul %15, %22, %cst_13 {dimension_numbers = #tpu.dot_dimension_numbers<[1], [0], [0], [1], [0, 0, 1, 1], [], []>} : vector<8x24xf32>, vector<24x16xf32>, vector<8x16xf32> -> vector<8x16xf32>
    %24 = vector.broadcast %16 : vector<8x1xf32> to vector<8x16xf32>
    %25 = arith.addf %23, %24 : vector<8x16xf32>
    %cst_14 = arith.constant 0.000000e+00 : f32
    %26 = vector.broadcast %cst_14 : f32 to vector<8x16xf32>
    %27 = arith.maximumf %25, %26 : vector<8x16xf32>
    %c0_15 = arith.constant 0 : index
    %c0_16 = arith.constant 0 : index
    %c0_17 = arith.constant 0 : index
    %28 = vector.load %arg6[%c0_15, %c0_16, %c0_17] : memref<1x8x16xf32, #tpu.memory_space<vmem>>, vector<1x8x16xf32>
    %29 = vector.shape_cast %28 : vector<1x8x16xf32> to vector<8x16xf32>
    %30 = vector.shape_cast %27 : vector<8x16xf32> to vector<1x8x16xf32>
    tpu.vector_store %arg6[%c0_15, %c0_16, %c0_17], %30 {strides = array<i32>} : memref<1x8x16xf32, #tpu.memory_space<vmem>>, vector<1x8x16xf32>,
    %31 = tpu.iota {dimensions = array<i32: 0>} : vector<16x8xi32>
    %32 = tpu.iota {dimensions = array<i32: 1>} : vector<16x8xi32>
    %c2_i32 = arith.constant 2 : i32
    %33 = vector.broadcast %c2_i32 : i32 to vector<16x8xi32>
    %34 = arith.muli %33, %32 : vector<16x8xi32>
    %35 = arith.cmpi eq, %31, %34 : vector<16x8xi32>
    %36 = arith.extui %35 : vector<16x8xi1> to vector<16x8xi32>
    %37 = arith.sitofp %36 : vector<16x8xi32> to vector<16x8xf32>
    %c2_i32_18 = arith.constant 2 : i32
    %38 = vector.broadcast %c2_i32_18 : i32 to vector<16x8xi32>
    %39 = arith.muli %38, %32 : vector<16x8xi32>
    %c1_i32 = arith.constant 1 : i32
    %40 = vector.broadcast %c1_i32 : i32 to vector<16x8xi32>
    %41 = arith.addi %39, %40 : vector<16x8xi32>
    %42 = arith.cmpi eq, %31, %41 : vector<16x8xi32>
    %43 = arith.extui %42 : vector<16x8xi1> to vector<16x8xi32>
    %44 = arith.sitofp %43 : vector<16x8xi32> to vector<16x8xf32>
    %cst_19 = arith.constant dense<0.000000e+00> : vector<8x8xf32>
    %45 = tpu.matmul %27, %37, %cst_19 {dimension_numbers = #tpu.dot_dimension_numbers<[1], [0], [0], [1], [0, 0, 1, 1], [], []>} : vector<8x16xf32>, vector<16x8xf32>, vector<8x8xf32> -> vector<8x8xf32>
    %cst_20 = arith.constant dense<0.000000e+00> : vector<8x8xf32>
    %46 = tpu.matmul %27, %44, %cst_20 {dimension_numbers = #tpu.dot_dimension_numbers<[1], [0], [0], [1], [0, 0, 1, 1], [], []>} : vector<8x16xf32>, vector<16x8xf32>, vector<8x8xf32> -> vector<8x8xf32>
    %47 = arith.maximumf %45, %46 : vector<8x8xf32>
    %c0_21 = arith.constant 0 : index
    %c0_22 = arith.constant 0 : index
    %c0_23 = arith.constant 0 : index
    %48 = vector.load %arg7[%c0_21, %c0_22, %c0_23] : memref<1x8x8xf32, #tpu.memory_space<vmem>>, vector<1x8x8xf32>
    %49 = vector.shape_cast %48 : vector<1x8x8xf32> to vector<8x8xf32>
    %50 = vector.shape_cast %47 : vector<8x8xf32> to vector<1x8x8xf32>
    tpu.vector_store %arg7[%c0_21, %c0_22, %c0_23], %50 {strides = array<i32>} : memref<1x8x8xf32, #tpu.memory_space<vmem>>, vector<1x8x8xf32>,
    return
  }
  func.func @transform_0(%arg0: i32) -> (i32, i32, i32) {
    %c0_i32 = arith.constant 0 : i32
    %c0_i32_0 = arith.constant 0 : i32
    %c0_i32_1 = arith.constant 0 : i32
    return %arg0, %c0_i32, %c0_i32_0 : i32, i32, i32
  }
  func.func @transform_1(%arg0: i32) -> (i32, i32) {
    %c0_i32 = arith.constant 0 : i32
    %c0_i32_0 = arith.constant 0 : i32
    %c0_i32_1 = arith.constant 0 : i32
    return %c0_i32, %c0_i32_0 : i32, i32
  }
  func.func @transform_2(%arg0: i32) -> (i32, i32) {
    %c0_i32 = arith.constant 0 : i32
    %c0_i32_0 = arith.constant 0 : i32
    %c0_i32_1 = arith.constant 0 : i32
    return %c0_i32, %c0_i32_0 : i32, i32
  }
  func.func @transform_3(%arg0: i32) -> (i32, i32) {
    %c0_i32 = arith.constant 0 : i32
    %c0_i32_0 = arith.constant 0 : i32
    %c0_i32_1 = arith.constant 0 : i32
    return %c0_i32, %c0_i32_0 : i32, i32
  }
  func.func @transform_4(%arg0: i32) -> (i32, i32) {
    %c0_i32 = arith.constant 0 : i32
    %c0_i32_0 = arith.constant 0 : i32
    %c0_i32_1 = arith.constant 0 : i32
    return %c0_i32, %c0_i32_0 : i32, i32
  }
  func.func @transform_5(%arg0: i32) -> (i32, i32, i32) {
    %c0_i32 = arith.constant 0 : i32
    %c0_i32_0 = arith.constant 0 : i32
    %c0_i32_1 = arith.constant 0 : i32
    return %arg0, %c0_i32, %c0_i32_0 : i32, i32, i32
  }
  func.func @transform_6(%arg0: i32) -> (i32, i32, i32) {
    %c0_i32 = arith.constant 0 : i32
    %c0_i32_0 = arith.constant 0 : i32
    %c0_i32_1 = arith.constant 0 : i32
    return %arg0, %c0_i32, %c0_i32_0 : i32, i32, i32
  }
}

</mosaic_0001>

<llo_original>
// kernel: tpu_custom_call.1
$region0: #{tpu_custom_call.1}
  #allocation0 [shape = 'u32[]', space=smem, size = 0x4, offset = 0x4, fixed_abs, tag = 'smem constant byte address 0x4 - core index']
  #allocation1 [shape = 'u32[144,128]{1,0:T(1,128)}', space=vmem, size = 0x12000, scoped, tag = 'internal scratch']
  %s0 = inlined_call_operand.vmem [shape: f32[2,4,16], index: 0, kind: input, shape index: {}]
  %s1 = inlined_call_operand.vmem [shape: f32[8,12], index: 1, kind: input, shape index: {}]
  %s2 = inlined_call_operand.vmem [shape: f32[8,1], index: 2, kind: input, shape index: {}]
  %s3 = inlined_call_operand.hbm [shape: f32[8,24], index: 3, kind: input, shape index: {}]
  %s4 = inlined_call_operand.vmem [shape: f32[8,1], index: 4, kind: input, shape index: {}]
  %s5 = inlined_call_operand.hbm [shape: f32[2,8,16], index: 5, kind: output, shape index: {0}]
  %s6 = inlined_call_operand.hbm [shape: f32[2,8,8], index: 6, kind: output, shape index: {1}]
  %7 = xla_tuple %s5, %s6
  %s8 = sld [smem:[#allocation0]]
  $region65: #{tpu_custom_call.1} parent=0
    _
  %s10 = ssub.s32 1, %s8
  %s11 = scalar_select 0, %s10, %s8
  $region1: #{tpu_custom_call.1} parent=0
    #allocation2 [shape = 'u8[4096]{0}', space=vmem, size = 0x1000, scoped, tag = 'input window, operand 3, single buffered']
    #allocation3 [shape = 's32[2]{0}', space=sflag, size = 0x8, scoped, tag = 'scoped memory for tpu_custom_call.1']
    #allocation4 [shape = 's32[2]{0}', space=sflag, size = 0x8, scoped, tag = 'scoped memory for tpu_custom_call.1']
    #allocation5 [shape = 'u8[8192]{0}', space=vmem, size = 0x2000, scoped, tag = 'output window, operand 0']
    #allocation6 [shape = 'u8[8192]{0}', space=vmem, size = 0x2000, scoped, tag = 'output window, operand 1']
    #allocation7 [shape = 's32[2]{0}', space=sflag, size = 0x8, scoped, tag = 'scoped memory for tpu_custom_call.1']
    %12 = vsyncpa [#allocation3], 0
    %13 = vsyncpa [#allocation4], 0
    %s14 = scalar_lea.sflag [#allocation4], 1
    %15 = vsyncpa %s14, 0
    %16 = vsyncpa [#allocation7], 0
    %s17 = scalar_lea.sflag [#allocation7], 1
    %18 = vsyncpa %s17, 0
    loop: start=0, step=1, limit=4
    $region2: #{tpu_custom_call.1} parent=1 // loop_pre_header
      _
    $region3: #{tpu_custom_call.1} parent=1 // loop_header
      %s20 = sphi 0, %s24
      %p21 = scmp.ge.s32.totalorder %s20, 4
      %s30 = sphi 0, %s32
      %s33 = sphi 0, %s30
      %s34 = sphi 0, %s33
      %s50 = sphi 0, %s34
      %s54 = sphi 0, %s54
      %s56 = sphi 0, %s54
      %s57 = sphi 0, %s56
      %s71 = sphi 0, %s57
      %s75 = sphi 0, %s75
      %s77 = sphi 0, %s75
      %s78 = sphi 0, %s77
      %s92 = sphi 0, %s78
      %s96 = sphi 0, %s96
      %s98 = sphi 0, %s96
      %s99 = sphi 0, %s98
      %s113 = sphi 0, %s99
      %s117 = sphi 0, %s117
      %s119 = sphi 0, %s117
      %s120 = sphi 0, %s119
      %s134 = sphi 0, %s120
      %s140 = sphi 0, %s142
      %s143 = sphi 0, %s140
      %s144 = sphi 0, %s143
      %s160 = sphi 0, %s144
      %s166 = sphi 0, %s168
      %s169 = sphi 0, %s166
      %s170 = sphi 0, %s169
      %s186 = sphi 0, %s170
    $region4: #{tpu_custom_call.1} parent=1 // loop_header_branch
      %23 = sbr.rel (%p21) target = $region8
    $region5: #{tpu_custom_call.1} parent=1 // loop_body
      %s25 = ssub.s32 %s20, 1
      %s26 = ssub.s32 %s20, 2
      %s27 = sadd.s32 %s20, 1
      %s28 = ssub.s32 %s20, %s27
      %p29 = scmp.eq.s32.totalorder %s28, 0
      %s31 = sadd.s32 %s30, 1
      %s32 = scalar_select %p29, %s30, %s31
      %p35 = pneg %p29
      %p36 = scmp.eq.s32.totalorder %s20, 1
      %p37 = por %p35, %p36
      %p38 = scmp.ne.s32.totalorder %s30, %s33
      %p39 = scmp.eq.s32.totalorder %s20, 0
      %p40 = por %p38, %p39
      %p41 = scmp.ne.s32.totalorder %s30, %s33
      %p42 = scmp.eq.s32.totalorder %s25, 1
      %p43 = por %p41, %p42
      %p44 = scmp.ne.s32.totalorder %s33, %s34
      %p45 = scmp.eq.s32.totalorder %s25, 0
      %p46 = por %p44, %p45
      %p47 = scmp.ne.s32.totalorder %s33, %s34
      %p48 = scmp.eq.s32.totalorder %s26, 1
      %p49 = por %p47, %p48
      %p51 = scmp.ne.s32.totalorder %s34, %s50
      %p52 = scmp.eq.s32.totalorder %s26, 0
      %p53 = por %p51, %p52
      %s55 = sadd.s32 %s54, 1
      %p58 = scmp.eq.s32.totalorder %s20, 1
      %p59 = scmp.ne.s32.totalorder %s54, %s56
      %p60 = scmp.eq.s32.totalorder %s20, 0
      %p61 = por %p59, %p60
      %p62 = scmp.ne.s32.totalorder %s54, %s56
      %p63 = scmp.eq.s32.totalorder %s25, 1
      %p64 = por %p62, %p63
      %p65 = scmp.ne.s32.totalorder %s56, %s57
      %p66 = scmp.eq.s32.totalorder %s25, 0
      %p67 = por %p65, %p66
      %p68 = scmp.ne.s32.totalorder %s56, %s57
      %p69 = scmp.eq.s32.totalorder %s26, 1
      %p70 = por %p68, %p69
      %p72 = scmp.ne.s32.totalorder %s57, %s71
      %p73 = scmp.eq.s32.totalorder %s26, 0
      %p74 = por %p72, %p73
      %s76 = sadd.s32 %s75, 1
      %p79 = scmp.eq.s32.totalorder %s20, 1
      %p80 = scmp.ne.s32.totalorder %s75, %s77
      %p81 = scmp.eq.s32.totalorder %s20, 0
      %p82 = por %p80, %p81
      %p83 = scmp.ne.s32.totalorder %s75, %s77
      %p84 = scmp.eq.s32.totalorder %s25, 1
      %p85 = por %p83, %p84
      %p86 = scmp.ne.s32.totalorder %s77, %s78
      %p87 = scmp.eq.s32.totalorder %s25, 0
      %p88 = por %p86, %p87
      %p89 = scmp.ne.s32.totalorder %s77, %s78
      %p90 = scmp.eq.s32.totalorder %s26, 1
      %p91 = por %p89, %p90
      %p93 = scmp.ne.s32.totalorder %s78, %s92
      %p94 = scmp.eq.s32.totalorder %s26, 0
      %p95 = por %p93, %p94
      %s97 = sadd.s32 %s96, 1
      %p100 = scmp.eq.s32.totalorder %s20, 1
      %p101 = scmp.ne.s32.totalorder %s96, %s98
      %p102 = scmp.eq.s32.totalorder %s20, 0
      %p103 = por %p101, %p102
      %p104 = scmp.ne.s32.totalorder %s96, %s98
      %p105 = scmp.eq.s32.totalorder %s25, 1
      %p106 = por %p104, %p105
      %p107 = scmp.ne.s32.totalorder %s98, %s99
      %p108 = scmp.eq.s32.totalorder %s25, 0
      %p109 = por %p107, %p108
      %p110 = scmp.ne.s32.totalorder %s98, %s99
      %p111 = scmp.eq.s32.totalorder %s26, 1
      %p112 = por %p110, %p111
      %p114 = scmp.ne.s32.totalorder %s99, %s113
      %p115 = scmp.eq.s32.totalorder %s26, 0
      %p116 = por %p114, %p115
      %s118 = sadd.s32 %s117, 1
      %p121 = scmp.eq.s32.totalorder %s20, 1
      %p122 = scmp.ne.s32.totalorder %s117, %s119
      %p123 = scmp.eq.s32.totalorder %s20, 0
      %p124 = por %p122, %p123
      %p125 = scmp.ne.s32.totalorder %s117, %s119
      %p126 = scmp.eq.s32.totalorder %s25, 1
      %p127 = por %p125, %p126
      %p128 = scmp.ne.s32.totalorder %s119, %s120
      %p129 = scmp.eq.s32.totalorder %s25, 0
      %p130 = por %p128, %p129
      %p131 = scmp.ne.s32.totalorder %s119, %s120
      %p132 = scmp.eq.s32.totalorder %s26, 1
      %p133 = por %p131, %p132
      %p135 = scmp.ne.s32.totalorder %s120, %s134
      %p136 = scmp.eq.s32.totalorder %s26, 0
      %p137 = por %p135, %p136
      %s138 = ssub.s32 %s20, %s27
      %p139 = scmp.eq.s32.totalorder %s138, 0
      %s141 = sadd.s32 %s140, 1
      %s142 = scalar_select %p139, %s140, %s141
      %p145 = pneg %p139
      %p146 = scmp.eq.s32.totalorder %s20, 1
      %p147 = por %p145, %p146
      %p148 = scmp.ne.s32.totalorder %s140, %s143
      %p149 = scmp.eq.s32.totalorder %s20, 0
      %p150 = por %p148, %p149
      %p151 = scmp.ne.s32.totalorder %s140, %s143
      %p152 = scmp.eq.s32.totalorder %s25, 1
      %p153 = por %p151, %p152
      %p154 = scmp.ne.s32.totalorder %s143, %s144
      %p155 = scmp.eq.s32.totalorder %s25, 0
      %p156 = por %p154, %p155
      %p157 = scmp.ne.s32.totalorder %s143, %s144
      %p158 = scmp.eq.s32.totalorder %s26, 1
      %p159 = por %p157, %p158
      %p161 = scmp.ne.s32.totalorder %s144, %s160
      %p162 = scmp.eq.s32.totalorder %s26, 0
      %p163 = por %p161, %p162
      %s164 = ssub.s32 %s20, %s27
      %p165 = scmp.eq.s32.totalorder %s164, 0
      %s167 = sadd.s32 %s166, 1
      %s168 = scalar_select %p165, %s166, %s167
      %p171 = pneg %p165
      %p172 = scmp.eq.s32.totalorder %s20, 1
      %p173 = por %p171, %p172
      %p174 = scmp.ne.s32.totalorder %s166, %s169
      %p175 = scmp.eq.s32.totalorder %s20, 0
      %p176 = por %p174, %p175
      %p177 = scmp.ne.s32.totalorder %s166, %s169
      %p178 = scmp.eq.s32.totalorder %s25, 1
      %p179 = por %p177, %p178
      %p180 = scmp.ne.s32.totalorder %s169, %s170
      %p181 = scmp.eq.s32.totalorder %s25, 0
      %p182 = por %p180, %p181
      %p183 = scmp.ne.s32.totalorder %s169, %s170
      %p184 = scmp.eq.s32.totalorder %s26, 1
      %p185 = por %p183, %p184
      %p187 = scmp.ne.s32.totalorder %s170, %s186
      %p188 = scmp.eq.s32.totalorder %s26, 0
      %p189 = por %p187, %p188
      %p190 = scmp.le.s32.totalorder 1, %s20
      %p191 = scmp.lt.s32.totalorder %s20, 3
      %p192 = pnand %p190, %p191
      %p193 = pneg %p192
      // Predicated region
      $region9: #{tpu_custom_call.1} parent=5 // pred_check
        _
      $region10: #{tpu_custom_call.1} parent=5 // pred_check_branch
        %195 = sbr.rel (%p192) target = $region12
      $region11: #{tpu_custom_call.1} parent=5 // pred_region
        %s196 = ssub.s32 %s20, 1
        // Predicated region
        $region13: #{tpu_custom_call.1} parent=11 // pred_check
          %p197 = pneg %p67
        $region14: #{tpu_custom_call.1} parent=11 // pred_check_branch
          %199 = sbr.rel (%p197) target = $region16
        $region15: #{tpu_custom_call.1} parent=11 // pred_region
          _
        $region16: #{tpu_custom_call.1} parent=11 // pred_fallthru
          _
        // Predicated region
        $region17: #{tpu_custom_call.1} parent=11 // pred_check
          %p200 = pneg %p88
        $region18: #{tpu_custom_call.1} parent=11 // pred_check_branch
          %202 = sbr.rel (%p200) target = $region20
        $region19: #{tpu_custom_call.1} parent=11 // pred_region
          _
        $region20: #{tpu_custom_call.1} parent=11 // pred_fallthru
          _
        // Predicated region
        $region21: #{tpu_custom_call.1} parent=11 // pred_check
          %p203 = pneg %p109
        $region22: #{tpu_custom_call.1} parent=11 // pred_check_branch
          %205 = sbr.rel (%p203) target = $region24
        $region23: #{tpu_custom_call.1} parent=11 // pred_region
          %s207 = ssub.s32 128, 128
          %208 = vsyncadd [#allocation3], %s207
          %s210 = sshll.u32 [#allocation2], 4
          %s211 = int_to_ptr.vmem [resolvable:$true] %s210
          %213 = dma.hbm_to_vmem [thread:$0]  %s3, 128, %s211, [#allocation3]
        $region24: #{tpu_custom_call.1} parent=11 // pred_fallthru
          _
        // Predicated region
        $region25: #{tpu_custom_call.1} parent=11 // pred_check
          %p214 = pneg %p130
        $region26: #{tpu_custom_call.1} parent=11 // pred_check_branch
          %216 = sbr.rel (%p214) target = $region28
        $region27: #{tpu_custom_call.1} parent=11 // pred_region
          _
        $region28: #{tpu_custom_call.1} parent=11 // pred_fallthru
          _
      $region12: #{tpu_custom_call.1} parent=5 // pred_fallthru
        _
      %p217 = scmp.lt.s32.totalorder %s20, 2
      // Predicated region
      $region29: #{tpu_custom_call.1} parent=5 // pred_check
        %p218 = pneg %p217
      $region30: #{tpu_custom_call.1} parent=5 // pred_check_branch
        %220 = sbr.rel (%p218) target = $region32
      $region31: #{tpu_custom_call.1} parent=5 // pred_region
        // Predicated region
        $region33: #{tpu_custom_call.1} parent=31 // pred_check
          %p221 = pneg %p40
        $region34: #{tpu_custom_call.1} parent=31 // pred_check_branch
          %223 = sbr.rel (%p221) target = $region36
        $region35: #{tpu_custom_call.1} parent=31 // pred_region
          %p224 = scmp.lt.s32.totalorder %s20, 1
          %s225 = scalar_select %p224, %s20, 1
          %s226 = smul.addr %s225, 4
          %s227 = scalar_lea.vmem %s0, %s226
        $region36: #{tpu_custom_call.1} parent=31 // pred_fallthru
          _
      $region32: #{tpu_custom_call.1} parent=5 // pred_fallthru
        _
      %p228 = scmp.le.s32.totalorder 1, %s20
      %p229 = scmp.lt.s32.totalorder %s20, 3
      %p230 = pnand %p228, %p229
      %p231 = pneg %p230
      // Predicated region
      $region37: #{tpu_custom_call.1} parent=5 // pred_check
        _
      $region38: #{tpu_custom_call.1} parent=5 // pred_check_branch
        %233 = sbr.rel (%p230) target = $region40
      $region39: #{tpu_custom_call.1} parent=5 // pred_region
        %s234 = ssub.s32 %s20, 1
        // Predicated region
        $region41: #{tpu_custom_call.1} parent=39 // pred_check
          %p235 = pneg %p109
        $region42: #{tpu_custom_call.1} parent=39 // pred_check_branch
          %237 = sbr.rel (%p235) target = $region44
        $region43: #{tpu_custom_call.1} parent=39 // pred_region
          %238 = dma.done [#allocation3], 128
        $region44: #{tpu_custom_call.1} parent=39 // pred_fallthru
          _
        %p239 = scmp.lt.s32.totalorder %s25, 1
        %s240 = scalar_select %p239, %s25, 1
        %s241 = smul.addr %s240, 4
        %s242 = scalar_lea.vmem %s0, %s241
        %p243 = pneg %p46
        %p244 = pneg %p43
        %p245 = pneg %p67
        %p246 = pneg %p64
        %p247 = pneg %p88
        %p248 = pneg %p85
        %p249 = pneg %p109
        %p250 = pneg %p106
        %p251 = pneg %p130
        %p252 = pneg %p127
        %p253 = pneg %p156
        %p254 = pneg %p153
        %s255 = sand.u32 %s143, 1
        %s256 = scalar_lea.sflag [#allocation4], %s255
        %s257 = sand.u32 %s143, 1
        %s258 = smul.addr %s257, 8
        %s259 = scalar_lea.vmem [#allocation5], %s258
        %p260 = pneg %p182
        %p261 = pneg %p179
        %s262 = sand.u32 %s169, 1
        %s263 = scalar_lea.sflag [#allocation7], %s262
        %s264 = sand.u32 %s169, 1
        %s265 = smul.addr %s264, 8
        %s266 = scalar_lea.vmem [#allocation6], %s265
        %p267 = scmp.lt.s32.totalorder %s25, 1
        %s268 = scalar_select %p267, %s25, 1
        %s269 = smul.addr %s268, 4
        %s270 = scalar_lea.vmem %s0, %s269
        %v271 = vld [vmem:[%s270] sm:$0xf]
        %v272 = vld [vmem:[%s1] sm:$0xff]
        %v273 = vld [vmem:[%s2] sm:$0xff]
        %275 = vrot.lane.b32.xlu0 %v271, 1
        %v276 = vpop.permute.xlu0 %275
        %vm278 = vcmask 7168
        %v279 = vsel %vm278, 0.0, %v276
        %280 = vrot.lane.b32.xlu0 %v271, 127
        %v281 = vpop.permute.xlu0 %280
        %vm283 = vcmask 121856
        %v284 = vsel %vm283, %v281, 0.0
        %v285 = vrot.slane %v271, 4
        %vm287 = vcmask 1043456
        %v288 = vsel %vm287, %v279, %v285
        %290 = vset.pattern.permute.xlu0 0
        %291 = vperm.xlu0 %290, %v273
        %v292 = vpop.permute.xlu0 %291
        %vm294 = vcmask 97280
        %v296 = vsel %vm294, %v272, 0
        %v299 = vsel %vm287, %v284, 0
        %301 = vmatprep.subr.mxu0 0.0
        %302 = vmatpush1.msra.mxu0 0.0
        %303 = vmatprep.subr.mxu0 0.0
        %304 = vmatpush1.msra.mxu0 0.0
        %305 = vmatprep.subr.mxu0 0.0
        %306 = vmatpush1.msra.mxu0 0.0
        %307 = vmatprep.subr.mxu0 0.0
        %308 = vmatpush1.msra.mxu0 0.0
        %309 = vmatprep.subr.mxu0 0.0
        %310 = vmatpush1.msra.mxu0 0.0
        %311 = vmatprep.subr.mxu0 0.0
        %312 = vmatpush1.msra.mxu0 0.0
        %313 = vmatprep.subr.mxu0 0.0
        %314 = vmatpush1.msra.mxu0 0.0
        %315 = vmatprep.subr.mxu0 0.0
        %316 = vmatpush1.msra.mxu0 0.0
        %317 = vmatprep.subr.mxu0 0.0
        %318 = vmatpush1.msra.mxu0 0.0
        %319 = vmatprep.subr.mxu0 0.0
        %320 = vmatpush1.msra.mxu0 0.0
        %321 = vmatprep.subr.mxu0 0.0
        %322 = vmatpush1.msra.mxu0 0.0
        %323 = vmatprep.subr.mxu0 0.0
        %324 = vmatpush1.msra.mxu0 0.0
        %325 = vmatprep.subr.mxu0 0.0
        %326 = vmatpush1.msra.mxu0 0.0
        %327 = vmatprep.subr.mxu0 0.0
        %328 = vmatpush1.msra.mxu0 0.0
        %329 = vmatprep.subr.mxu0 0.0
        %330 = vmatpush1.msra.mxu0 %v299
        %331 = vmatprep.subr.mxu0 0.0
        %332 = vmatpush1.msra.mxu0 %v288
        %333 = vmatprep.subr.mxu0 0.0
        %334 = vmatpush2.msra.mxu0 0.0
        %335 = vmatprep.subr.mxu0 0.0
        %336 = vmatpush2.msra.mxu0 0.0
        %337 = vmatprep.subr.mxu0 0.0
        %338 = vmatpush2.msra.mxu0 0.0
        %339 = vmatprep.subr.mxu0 0.0
        %340 = vmatpush2.msra.mxu0 0.0
        %341 = vmatprep.subr.mxu0 0.0
        %342 = vmatpush2.msra.mxu0 0.0
        %343 = vmatprep.subr.mxu0 0.0
        %344 = vmatpush2.msra.mxu0 0.0
        %345 = vmatprep.subr.mxu0 0.0
        %346 = vmatpush2.msra.mxu0 0.0
        %347 = vmatprep.subr.mxu0 0.0
        %348 = vmatpush2.msra.mxu0 0.0
        %349 = vmatprep.subr.mxu0 0.0
        %350 = vmatpush2.msra.mxu0 0.0
        %351 = vmatprep.subr.mxu0 0.0
        %352 = vmatpush2.msra.mxu0 0.0
        %353 = vmatprep.subr.mxu0 0.0
        %354 = vmatpush2.msra.mxu0 0.0
        %355 = vmatprep.subr.mxu0 0.0
        %356 = vmatpush2.msra.mxu0 0.0
        %357 = vmatprep.subr.mxu0 0.0
        %358 = vmatpush2.msra.mxu0 0.0
        %359 = vmatprep.subr.mxu0 0.0
        %360 = vmatpush2.msra.mxu0 0.0
        %361 = vmatprep.subr.mxu0 0.0
        %362 = vmatpush2.msra.mxu0 0.0
        %363 = vmatprep.subr.mxu0 0.0
        %364 = vmatpush2.msra.mxu0 0.0
        %365 = vmatprep.mubr.f32.mxu0 0.0
        %366 = vmatmul.mubr.f32.gmra.mxu0 %v296
        %v367 = vpop.f32.mrf.mxu0
        %v368 = vadd.f32 %v292, %v367
        %v369 = vpop.f32.mrf.mxu0
        %370 = vdwg.mxu0
        %v371 = vmax.f32 %v368, 0.0
        %v372 = vld [vmem:[#allocation2] sm:$0xff]
        %v373 = vld [vmem:[%s4] sm:$0xff]
        %375 = vrot.lane.b32.xlu0 %v371, 1
        %v376 = vpop.permute.xlu0 %375
        %v378 = vsel %vm278, 0.0, %v376
        %379 = vrot.lane.b32.xlu0 %v371, 127
        %v380 = vpop.permute.xlu0 %379
        %v382 = vsel %vm283, %v380, 0.0
        %384 = vset.pattern.permute.xlu0 0
        %385 = vperm.xlu0 %384, %v373
        %v386 = vpop.permute.xlu0 %385
        %vm388 = vcmask 195584
        %v390 = vsel %vm388, %v372, 0
        %392 = vmatprep.subr.mxu0 0.0
        %393 = vmatpush1.msra.mxu0 0.0
        %394 = vmatprep.subr.mxu0 0.0
        %395 = vmatpush1.msra.mxu0 0.0
        %396 = vmatprep.subr.mxu0 0.0
        %397 = vmatpush1.msra.mxu0 0.0
        %398 = vmatprep.subr.mxu0 0.0
        %399 = vmatpush1.msra.mxu0 0.0
        %400 = vmatprep.subr.mxu0 0.0
        %401 = vmatpush1.msra.mxu0 0.0
        %402 = vmatprep.subr.mxu0 0.0
        %403 = vmatpush1.msra.mxu0 0.0
        %404 = vmatprep.subr.mxu0 0.0
        %405 = vmatpush1.msra.mxu0 0.0
        %406 = vmatprep.subr.mxu0 0.0
        %407 = vmatpush1.msra.mxu0 0.0
        %408 = vmatprep.subr.mxu0 0.0
        %409 = vmatpush1.msra.mxu0 0.0
        %410 = vmatprep.subr.mxu0 0.0
        %411 = vmatpush1.msra.mxu0 0.0
        %412 = vmatprep.subr.mxu0 0.0
        %413 = vmatpush1.msra.mxu0 0.0
        %414 = vmatprep.subr.mxu0 0.0
        %415 = vmatpush1.msra.mxu0 0.0
        %416 = vmatprep.subr.mxu0 0.0
        %417 = vmatpush1.msra.mxu0 0.0
        %418 = vmatprep.subr.mxu0 0.0
        %419 = vmatpush1.msra.mxu0 %v382
        %420 = vmatprep.subr.mxu0 0.0
        %421 = vmatpush1.msra.mxu0 %v371
        %422 = vmatprep.subr.mxu0 0.0
        %423 = vmatpush1.msra.mxu0 %v378
        %424 = vmatprep.subr.mxu0 0.0
        %425 = vmatpush2.msra.mxu0 0.0
        %426 = vmatprep.subr.mxu0 0.0
        %427 = vmatpush2.msra.mxu0 0.0
        %428 = vmatprep.subr.mxu0 0.0
        %429 = vmatpush2.msra.mxu0 0.0
        %430 = vmatprep.subr.mxu0 0.0
        %431 = vmatpush2.msra.mxu0 0.0
        %432 = vmatprep.subr.mxu0 0.0
        %433 = vmatpush2.msra.mxu0 0.0
        %434 = vmatprep.subr.mxu0 0.0
        %435 = vmatpush2.msra.mxu0 0.0
        %436 = vmatprep.subr.mxu0 0.0
        %437 = vmatpush2.msra.mxu0 0.0
        %438 = vmatprep.subr.mxu0 0.0
        %439 = vmatpush2.msra.mxu0 0.0
        %440 = vmatprep.subr.mxu0 0.0
        %441 = vmatpush2.msra.mxu0 0.0
        %442 = vmatprep.subr.mxu0 0.0
        %443 = vmatpush2.msra.mxu0 0.0
        %444 = vmatprep.subr.mxu0 0.0
        %445 = vmatpush2.msra.mxu0 0.0
        %446 = vmatprep.subr.mxu0 0.0
        %447 = vmatpush2.msra.mxu0 0.0
        %448 = vmatprep.subr.mxu0 0.0
        %449 = vmatpush2.msra.mxu0 0.0
        %450 = vmatprep.subr.mxu0 0.0
        %451 = vmatpush2.msra.mxu0 0.0
        %452 = vmatprep.subr.mxu0 0.0
        %453 = vmatpush2.msra.mxu0 0.0
        %454 = vmatprep.subr.mxu0 0.0
        %455 = vmatpush2.msra.mxu0 0.0
        %456 = vmatprep.mubr.f32.mxu0 0.0
        %457 = vmatmul.mubr.f32.gmra.mxu0 %v390
        %v458 = vpop.f32.mrf.mxu0
        %v459 = vadd.f32 %v386, %v458
        %v460 = vpop.f32.mrf.mxu0
        %461 = vdwg.mxu0
        %v462 = vmax.f32 %v459, 0.0
        %vm463 = vcmask 130048
        %464 = vst.msk [vmem:[%s259] sm:$0xff] %vm463, %v462
        %v465 = vlaneseq
        %v466 = vshrl.u32 %v465, 7
        %v467 = vadd.s32 %v466, 8
        %v468 = vlaneseq
        %v469 = vand.u32 %v468, 127
        %v470 = vmul.u32 %v469, 2
        %vm471 = vcmp.eq.s32.totalorder %v466, %v470
        %vm472 = vcmp.eq.s32.totalorder %v467, %v470
        %v473 = vsel %vm471, 1, 0
        %v474 = vsel %vm472, 1, 0
        %v475 = vcvt.s32.f32 %v473
        %v476 = vcvt.s32.f32 %v474
        %v477 = vadd.s32 %v470, 1
        %vm478 = vcmp.eq.s32.totalorder %v466, %v477
        %vm479 = vcmp.eq.s32.totalorder %v467, %v477
        %v480 = vsel %vm478, 1, 0
        %v481 = vsel %vm479, 1, 0
        %v482 = vcvt.s32.f32 %v480
        %v483 = vcvt.s32.f32 %v481
        %v485 = vsel %vm463, %v462, 0
        %487 = vmatprep.subr.mxu0 0.0
        %488 = vmatpush1.msra.mxu0 0.0
        %489 = vmatprep.subr.mxu0 0.0
        %490 = vmatpush1.msra.mxu0 0.0
        %491 = vmatprep.subr.mxu0 0.0
        %492 = vmatpush1.msra.mxu0 0.0
        %493 = vmatprep.subr.mxu0 0.0
        %494 = vmatpush1.msra.mxu0 0.0
        %495 = vmatprep.subr.mxu0 0.0
        %496 = vmatpush1.msra.mxu0 0.0
        %497 = vmatprep.subr.mxu0 0.0
        %498 = vmatpush1.msra.mxu0 0.0
        %499 = vmatprep.subr.mxu0 0.0
        %500 = vmatpush1.msra.mxu0 0.0
        %501 = vmatprep.subr.mxu0 0.0
        %502 = vmatpush1.msra.mxu0 0.0
        %503 = vmatprep.subr.mxu0 0.0
        %504 = vmatpush1.msra.mxu0 0.0
        %505 = vmatprep.subr.mxu0 0.0
        %506 = vmatpush1.msra.mxu0 0.0
        %507 = vmatprep.subr.mxu0 0.0
        %508 = vmatpush1.msra.mxu0 0.0
        %509 = vmatprep.subr.mxu0 0.0
        %510 = vmatpush1.msra.mxu0 0.0
        %511 = vmatprep.subr.mxu0 0.0
        %512 = vmatpush1.msra.mxu0 0.0
        %513 = vmatprep.subr.mxu0 0.0
        %514 = vmatpush1.msra.mxu0 0.0
        %515 = vmatprep.subr.mxu0 0.0
        %516 = vmatpush1.msra.mxu0 %v476
        %517 = vmatprep.subr.mxu0 0.0
        %518 = vmatpush1.msra.mxu0 %v475
        %519 = vmatprep.subr.mxu0 0.0
        %520 = vmatpush2.msra.mxu0 0.0
        %521 = vmatprep.subr.mxu0 0.0
        %522 = vmatpush2.msra.mxu0 0.0
        %523 = vmatprep.subr.mxu0 0.0
        %524 = vmatpush2.msra.mxu0 0.0
        %525 = vmatprep.subr.mxu0 0.0
        %526 = vmatpush2.msra.mxu0 0.0
        %527 = vmatprep.subr.mxu0 0.0
        %528 = vmatpush2.msra.mxu0 0.0
        %529 = vmatprep.subr.mxu0 0.0
        %530 = vmatpush2.msra.mxu0 0.0
        %531 = vmatprep.subr.mxu0 0.0
        %532 = vmatpush2.msra.mxu0 0.0
        %533 = vmatprep.subr.mxu0 0.0
        %534 = vmatpush2.msra.mxu0 0.0
        %535 = vmatprep.subr.mxu0 0.0
        %536 = vmatpush2.msra.mxu0 0.0
        %537 = vmatprep.subr.mxu0 0.0
        %538 = vmatpush2.msra.mxu0 0.0
        %539 = vmatprep.subr.mxu0 0.0
        %540 = vmatpush2.msra.mxu0 0.0
        %541 = vmatprep.subr.mxu0 0.0
        %542 = vmatpush2.msra.mxu0 0.0
        %543 = vmatprep.subr.mxu0 0.0
        %544 = vmatpush2.msra.mxu0 0.0
        %545 = vmatprep.subr.mxu0 0.0
        %546 = vmatpush2.msra.mxu0 0.0
        %547 = vmatprep.subr.mxu0 0.0
        %548 = vmatpush2.msra.mxu0 0.0
        %549 = vmatprep.subr.mxu0 0.0
        %550 = vmatpush2.msra.mxu0 0.0
        %551 = vmatprep.mubr.f32.mxu0 0.0
        %552 = vmatmul.mubr.f32.gmra.mxu0 %v485
        %v553 = vpop.f32.mrf.mxu0
        %v554 = vadd.f32 0.0, %v553
        %v555 = vpop.f32.mrf.mxu0
        %556 = vdwg.mxu0
        %557 = vmatprep.subr.mxu0 0.0
        %558 = vmatpush1.msra.mxu0 0.0
        %559 = vmatprep.subr.mxu0 0.0
        %560 = vmatpush1.msra.mxu0 0.0
        %561 = vmatprep.subr.mxu0 0.0
        %562 = vmatpush1.msra.mxu0 0.0
        %563 = vmatprep.subr.mxu0 0.0
        %564 = vmatpush1.msra.mxu0 0.0
        %565 = vmatprep.subr.mxu0 0.0
        %566 = vmatpush1.msra.mxu0 0.0
        %567 = vmatprep.subr.mxu0 0.0
        %568 = vmatpush1.msra.mxu0 0.0
        %569 = vmatprep.subr.mxu0 0.0
        %570 = vmatpush1.msra.mxu0 0.0
        %571 = vmatprep.subr.mxu0 0.0
        %572 = vmatpush1.msra.mxu0 0.0
        %573 = vmatprep.subr.mxu0 0.0
        %574 = vmatpush1.msra.mxu0 0.0
        %575 = vmatprep.subr.mxu0 0.0
        %576 = vmatpush1.msra.mxu0 0.0
        %577 = vmatprep.subr.mxu0 0.0
        %578 = vmatpush1.msra.mxu0 0.0
        %579 = vmatprep.subr.mxu0 0.0
        %580 = vmatpush1.msra.mxu0 0.0
        %581 = vmatprep.subr.mxu0 0.0
        %582 = vmatpush1.msra.mxu0 0.0
        %583 = vmatprep.subr.mxu0 0.0
        %584 = vmatpush1.msra.mxu0 0.0
        %585 = vmatprep.subr.mxu0 0.0
        %586 = vmatpush1.msra.mxu0 %v483
        %587 = vmatprep.subr.mxu0 0.0
        %588 = vmatpush1.msra.mxu0 %v482
        %589 = vmatprep.subr.mxu0 0.0
        %590 = vmatpush2.msra.mxu0 0.0
        %591 = vmatprep.subr.mxu0 0.0
        %592 = vmatpush2.msra.mxu0 0.0
        %593 = vmatprep.subr.mxu0 0.0
        %594 = vmatpush2.msra.mxu0 0.0
        %595 = vmatprep.subr.mxu0 0.0
        %596 = vmatpush2.msra.mxu0 0.0
        %597 = vmatprep.subr.mxu0 0.0
        %598 = vmatpush2.msra.mxu0 0.0
        %599 = vmatprep.subr.mxu0 0.0
        %600 = vmatpush2.msra.mxu0 0.0
        %601 = vmatprep.subr.mxu0 0.0
        %602 = vmatpush2.msra.mxu0 0.0
        %603 = vmatprep.subr.mxu0 0.0
        %604 = vmatpush2.msra.mxu0 0.0
        %605 = vmatprep.subr.mxu0 0.0
        %606 = vmatpush2.msra.mxu0 0.0
        %607 = vmatprep.subr.mxu0 0.0
        %608 = vmatpush2.msra.mxu0 0.0
        %609 = vmatprep.subr.mxu0 0.0
        %610 = vmatpush2.msra.mxu0 0.0
        %611 = vmatprep.subr.mxu0 0.0
        %612 = vmatpush2.msra.mxu0 0.0
        %613 = vmatprep.subr.mxu0 0.0
        %614 = vmatpush2.msra.mxu0 0.0
        %615 = vmatprep.subr.mxu0 0.0
        %616 = vmatpush2.msra.mxu0 0.0
        %617 = vmatprep.subr.mxu0 0.0
        %618 = vmatpush2.msra.mxu0 0.0
        %619 = vmatprep.subr.mxu0 0.0
        %620 = vmatpush2.msra.mxu0 0.0
        %621 = vmatprep.mubr.f32.mxu0 0.0
        %622 = vmatmul.mubr.f32.gmra.mxu0 %v485
        %v623 = vpop.f32.mrf.mxu0
        %v624 = vadd.f32 0.0, %v623
        %v625 = vpop.f32.mrf.mxu0
        %626 = vdwg.mxu0
        %v627 = vmax.f32 %v554, %v624
        %vm628 = vcmask 64512
        %629 = vst.msk [vmem:[%s266] sm:$0xff] %vm628, %v627
        %s630 = sand.u32 %s143, 1
        %s631 = scalar_lea.sflag [#allocation4], %s630
        %s632 = sand.u32 %s143, 1
        %s633 = smul.addr %s632, 8
        %s634 = scalar_lea.vmem [#allocation5], %s633
        %s635 = sand.u32 %s169, 1
        %s636 = scalar_lea.sflag [#allocation7], %s635
        %s637 = sand.u32 %s169, 1
        %s638 = smul.addr %s637, 8
        %s639 = scalar_lea.vmem [#allocation6], %s638
        // Predicated region
        $region45: #{tpu_custom_call.1} parent=39 // pred_check
          %p640 = pneg %p153
        $region46: #{tpu_custom_call.1} parent=39 // pred_check_branch
          %642 = sbr.rel (%p640) target = $region48
        $region47: #{tpu_custom_call.1} parent=39 // pred_region
          %s644 = ssub.s32 128, 128
          %645 = vsyncadd %s631, %s644
          %s646 = smul.addr %s25, 128
          %s647 = scalar_lea.hbm %s5, %s646
          %s649 = sshll.u32 %s634, 4
          %s650 = int_to_ptr.vmem [resolvable:$true] %s649
          %652 = dma.vmem_to_hbm [thread:$0]  %s650, 128, %s647, %s631
        $region48: #{tpu_custom_call.1} parent=39 // pred_fallthru
          _
        // Predicated region
        $region49: #{tpu_custom_call.1} parent=39 // pred_check
          %p653 = pneg %p179
        $region50: #{tpu_custom_call.1} parent=39 // pred_check_branch
          %655 = sbr.rel (%p653) target = $region52
        $region51: #{tpu_custom_call.1} parent=39 // pred_region
          %s657 = ssub.s32 128, 128
          %658 = vsyncadd %s636, %s657
          %s659 = smul.addr %s25, 128
          %s660 = scalar_lea.hbm %s6, %s659
          %s662 = sshll.u32 %s639, 4
          %s663 = int_to_ptr.vmem [resolvable:$true] %s662
          %665 = dma.vmem_to_hbm [thread:$0]  %s663, 128, %s660, %s636
        $region52: #{tpu_custom_call.1} parent=39 // pred_fallthru
          _
      $region40: #{tpu_custom_call.1} parent=5 // pred_fallthru
        _
      %p666 = scmp.le.s32.totalorder 2, %s20
      // Predicated region
      $region53: #{tpu_custom_call.1} parent=5 // pred_check
        %p667 = pneg %p666
      $region54: #{tpu_custom_call.1} parent=5 // pred_check_branch
        %669 = sbr.rel (%p667) target = $region56
      $region55: #{tpu_custom_call.1} parent=5 // pred_region
        %s670 = ssub.s32 %s20, 2
        // Predicated region
        $region57: #{tpu_custom_call.1} parent=55 // pred_check
          %p671 = pneg %p159
        $region58: #{tpu_custom_call.1} parent=55 // pred_check_branch
          %673 = sbr.rel (%p671) target = $region60
        $region59: #{tpu_custom_call.1} parent=55 // pred_region
          %s674 = sand.u32 %s144, 1
          %s675 = scalar_lea.sflag [#allocation4], %s674
          %s676 = sand.u32 %s144, 1
          %s677 = smul.addr %s676, 8
          %s678 = scalar_lea.vmem [#allocation5], %s677
          %679 = dma.done %s675, 128
        $region60: #{tpu_custom_call.1} parent=55 // pred_fallthru
          _
        // Predicated region
        $region61: #{tpu_custom_call.1} parent=55 // pred_check
          %p680 = pneg %p185
        $region62: #{tpu_custom_call.1} parent=55 // pred_check_branch
          %682 = sbr.rel (%p680) target = $region64
        $region63: #{tpu_custom_call.1} parent=55 // pred_region
          %s683 = sand.u32 %s170, 1
          %s684 = scalar_lea.sflag [#allocation7], %s683
          %s685 = sand.u32 %s170, 1
          %s686 = smul.addr %s685, 8
          %s687 = scalar_lea.vmem [#allocation6], %s686
          %688 = dma.done %s684, 128
        $region64: #{tpu_custom_call.1} parent=55 // pred_fallthru
          _
      $region56: #{tpu_custom_call.1} parent=5 // pred_fallthru
        _
    $region6: #{tpu_custom_call.1} parent=1 // loop_footer
      %s24 = sadd.s32 1, %s20
    $region7: #{tpu_custom_call.1} parent=1 // loop_footer_branch
      %19 = sbr.rel target = $region3
    $region8: #{tpu_custom_call.1} parent=1 // loop_exit
      _
    %689 = vsyncpa [#allocation3], 1
    %s690 = scalar_lea.sflag [#allocation3], 1
    %691 = vsyncpa %s690, 1
    %692 = vsyncpa [#allocation4], 1
    %s693 = scalar_lea.sflag [#allocation4], 1
    %694 = vsyncpa %s693, 1
    %695 = vsyncpa [#allocation7], 1
    %s696 = scalar_lea.sflag [#allocation7], 1
    %697 = vsyncpa %s696, 1

</llo_original>
